<compile_context>
chip_gen: v7x
topology: tpu7x:2x2x1
jax: 0.10.0
libtpu: 0.0.40
codegen_flags: <defaults>
</compile_context>

<pallas_src>
import math
import numpy as np
import jax
import jax.numpy as jnp
from jax.experimental import pallas as pl
from jax.experimental.pallas import tpu as pltpu


def _round_up(n, m):
    return ((n + m - 1) // m) * m


def _target_block_bytes():
    """Per-generation VMEM tile budget.  With BlockSpec double-buffering the resident footprint
    is ~4x this (2 input bufs + 2 output bufs), kept under every chip's default scoped VMEM."""
    try:
        kind = jax.devices()[0].device_kind.lower()
    except Exception:
        kind = ""
    if ("v5 lite" in kind) or ("v5e" in kind) or ("v5lite" in kind):
        return 2 << 20          # 2 MiB tile  -> ~8 MiB buffered  (v5e: 16 MiB default scoped)
    if ("v6" in kind) or ("v7" in kind):
        return 4 << 20          # 4 MiB tile  -> ~16 MiB buffered (v6e/v7x: 32 MiB default scoped)
    return 2 << 20              # unknown chip: conservative, safe everywhere


def _random_kernel(w_ref, b_ref, x_ref, o_ref):
    # w_ref, b_ref: (1, 1) f32 scalars in SMEM
    # x_ref, o_ref: (tr, lanes) tiles in VMEM
    w = w_ref[0, 0]
    b = b_ref[0, 0]
    # Compute in f32 (v5e has no bf16 VPU), single explicit cast at the store.
    o_ref[...] = (x_ref[...].astype(jnp.float32) * w + b).astype(o_ref.dtype)


def _xla_forward(x, weight, bias):
    # Fused elementwise scale+bias — already at HBM roofline for small / awkward shapes.
    w = weight.reshape(()).astype(jnp.float32)
    b = bias.reshape(()).astype(jnp.float32)
    return (x.astype(jnp.float32) * w + b).astype(x.dtype)


def random_forward(x, weight, bias, *, min_pallas_elements=1 << 21):
    """Equivalent of torch.nn.functional.linear(x, weight(1,1), bias(1,1))."""
    assert x.shape[-1] == 1, "in_features of this module is 1"
    orig_shape = x.shape
    dtype = x.dtype
    m = int(np.prod(orig_shape))  # last dim is 1, so this is the number of scalar elements

    # Small inputs: pallas_call launch overhead dominates; XLA is optimal.
    if m < min_pallas_elements:
        return _xla_forward(x, weight, bias)

    # Pick the widest lane count (multiple of 128) that divides m, so the 2-D view is a free
    # bitcast of the contiguous flat array — no pad, no output slice.
    lanes = None
    for cand in (1024, 512, 256, 128):
        if m % cand == 0:
            lanes = cand
            break
    if lanes is None:
        # No zero-copy lane-dense view exists; padding/slicing would add full extra HBM passes,
        # so the fused XLA elementwise path is strictly better here.
        return _xla_forward(x, weight, bias)

    r = m // lanes
    itemsize = jnp.dtype(dtype).itemsize
    tr = max(8, (_target_block_bytes() // (lanes * itemsize)) // 8 * 8)

    if r < 8:
        tr = r                                   # block row dim == full array dim (allowed)
    elif r < 16:
        tr = 8                                   # masked edge block handles the remainder
    elif r <= tr:
        tr = _round_up(pl.cdiv(r, 2), 8)         # force >=2 blocks so both v7x TCs stream
    grid = (pl.cdiv(r, tr),)                     # non-divisible r -> masked final block only

    x2d = x.reshape(r, lanes)                    # contiguous -> free bitcast, no copy
    w32 = weight.astype(jnp.float32).reshape(1, 1)
    b32 = bias.astype(jnp.float32).reshape(1, 1)

    out2d = pl.pallas_call(
        _random_kernel,
        out_shape=jax.ShapeDtypeStruct((r, lanes), dtype),
        grid=grid,
        in_specs=[
            pl.BlockSpec((1, 1), lambda i: (0, 0),
                         memory_space=pltpu.MemorySpace.SMEM),   # weight (1,1) f32
            pl.BlockSpec((1, 1), lambda i: (0, 0),
                         memory_space=pltpu.MemorySpace.SMEM),   # bias   (1,1) f32
            pl.BlockSpec((tr, lanes), lambda i: (i, 0)),         # x tile (VMEM)
        ],
        out_specs=pl.BlockSpec((tr, lanes), lambda i: (i, 0)),
        compiler_params=pltpu.CompilerParams(
            dimension_semantics=("parallel",),   # shard row-blocks across v7x's 2 TCs
        ),
    )(w32, b32, x2d)

    return out2d.reshape(orig_shape)


if __name__ == "__main__":
    key = jax.random.PRNGKey(0)
    kx, kw, kb, kx2, kx3, kx4 = jax.random.split(key, 6)

    # Deterministic parameter init matching the module's __init__:
    #   weight ~ U(-sqrt(1/4), sqrt(1/4)) of shape (1, 1);  bias ~ U(-1, 1) of shape (1, 1)
    k = 1.0 / 4.0
    weight = jax.random.uniform(
        kw, (1, 1), dtype=jnp.float32, minval=-math.sqrt(k), maxval=math.sqrt(k)
    )
    bias = jax.random.uniform(kb, (1, 1), dtype=jnp.float32, minval=-1.0, maxval=1.0)

    def ref_fn(x):
        return (x.astype(jnp.float32) * weight[0, 0] + bias[0, 0]).astype(x.dtype)

    # 1) Small input, force the Pallas path -> single (1, 128) block.
    x = jax.random.normal(kx, (2, 4, 16, 1), dtype=jnp.float32)
    out = jax.block_until_ready(random_forward(x, weight, bias, min_pallas_elements=0))
    np.testing.assert_allclose(np.asarray(out), np.asarray(ref_fn(x)), rtol=1e-6, atol=1e-6)

    # 2) Rows not divisible by the block -> grid of 2 with a masked final block (zero-copy path).
    x2 = jax.random.normal(kx2, (23, 1024, 1), dtype=jnp.float32)
    out2 = jax.block_until_ready(random_forward(x2, weight, bias, min_pallas_elements=0))
    np.testing.assert_allclose(np.asarray(out2), np.asarray(ref_fn(x2)), rtol=1e-6, atol=1e-6)

    # 3) bf16 input -> f32 compute in-kernel, cast at the store; grid of 2 row-blocks.
    x3 = jax.random.normal(kx3, (16, 1024, 1), dtype=jnp.bfloat16)
    out3 = jax.block_until_ready(random_forward(x3, weight, bias, min_pallas_elements=0))
    np.testing.assert_allclose(np.asarray(out3).astype(np.float32),
                               np.asarray(ref_fn(x3)).astype(np.float32),
                               rtol=1e-2, atol=1e-2)

    # 4) Element count not a multiple of 128 -> XLA fallback (no pad/slice traffic).
    x4 = jax.random.normal(kx4, (3, 5, 1), dtype=jnp.float32)
    out4 = jax.block_until_ready(random_forward(x4, weight, bias, min_pallas_elements=0))
    np.testing.assert_allclose(np.asarray(out4), np.asarray(ref_fn(x4)), rtol=1e-6, atol=1e-6)

    # 5) Default threshold -> tiny-input XLA fast path.
    out5 = jax.block_until_ready(random_forward(x, weight, bias))
    np.testing.assert_allclose(np.asarray(out5), np.asarray(ref_fn(x)), rtol=1e-6, atol=1e-6)

    print("KERNEL_OK")
</pallas_src>

<mosaic_0001>
module attributes {stable_mosaic.version = 11 : i64} {
  func.func @_random_kernel(%arg0: i32, %arg1: memref<1x1xf32, #tpu.memory_space<smem>>, %arg2: memref<1x1xf32, #tpu.memory_space<smem>>, %arg3: memref<1x128xf32, #tpu.memory_space<vmem>>, %arg4: memref<1x128xf32, #tpu.memory_space<vmem>>) attributes {dimension_semantics = [#tpu.dimension_semantics<parallel>], iteration_bounds = array<i64: 1>, scalar_prefetch = 0 : i64, scratch_operands = 0 : i64, tpu.core_type = #tpu.core_type<tc>, window_params = [{transform_indices = @transform_0, window_bounds = array<i64: 1, 1>}, {transform_indices = @transform_1, window_bounds = array<i64: 1, 1>}, {transform_indices = @transform_2, window_bounds = array<i64: 1, 128>}, {transform_indices = @transform_3, window_bounds = array<i64: 1, 128>}]} {
    %c0 = arith.constant 0 : index
    %c0_0 = arith.constant 0 : index
    %0 = memref.load %arg1[%c0, %c0_0] : memref<1x1xf32, #tpu.memory_space<smem>>
    %c0_1 = arith.constant 0 : index
    %c0_2 = arith.constant 0 : index
    %1 = memref.load %arg2[%c0_1, %c0_2] : memref<1x1xf32, #tpu.memory_space<smem>>
    %c0_3 = arith.constant 0 : index
    %c0_4 = arith.constant 0 : index
    %2 = vector.load %arg3[%c0_3, %c0_4] : memref<1x128xf32, #tpu.memory_space<vmem>>, vector<1x128xf32>
    %3 = vector.broadcast %0 : f32 to vector<1x128xf32>
    %4 = arith.mulf %2, %3 : vector<1x128xf32>
    %5 = vector.broadcast %1 : f32 to vector<1x128xf32>
    %6 = arith.addf %4, %5 : vector<1x128xf32>
    %c0_5 = arith.constant 0 : index
    %c0_6 = arith.constant 0 : index
    %7 = vector.load %arg4[%c0_5, %c0_6] : memref<1x128xf32, #tpu.memory_space<vmem>>, vector<1x128xf32>
    tpu.vector_store %arg4[%c0_5, %c0_6], %6 {strides = array<i32>} : memref<1x128xf32, #tpu.memory_space<vmem>>, vector<1x128xf32>,
    return
  }
  func.func @transform_0(%arg0: i32) -> (i32, i32) {
    %c0_i32 = arith.constant 0 : i32
    %c0_i32_0 = arith.constant 0 : i32
    %c0_i32_1 = arith.constant 0 : i32
    return %c0_i32, %c0_i32_0 : i32, i32
  }
  func.func @transform_1(%arg0: i32) -> (i32, i32) {
    %c0_i32 = arith.constant 0 : i32
    %c0_i32_0 = arith.constant 0 : i32
    %c0_i32_1 = arith.constant 0 : i32
    return %c0_i32, %c0_i32_0 : i32, i32
  }
  func.func @transform_2(%arg0: i32) -> (i32, i32) {
    %c0_i32 = arith.constant 0 : i32
    %c0_i32_0 = arith.constant 0 : i32
    return %arg0, %c0_i32 : i32, i32
  }
  func.func @transform_3(%arg0: i32) -> (i32, i32) {
    %c0_i32 = arith.constant 0 : i32
    %c0_i32_0 = arith.constant 0 : i32
    return %arg0, %c0_i32 : i32, i32
  }
}

</mosaic_0001>

<llo_original>
// kernel: tpu_custom_call.1
$region0: #{tpu_custom_call.1}
  #allocation0 [shape = 'u32[]', space=smem, size = 0x4, offset = 0x4, fixed_abs, tag = 'smem constant byte address 0x4 - core index']
  #allocation1 [shape = 'u32[144,128]{1,0:T(1,128)}', space=vmem, size = 0x12000, scoped, tag = 'internal scratch']
  #allocation2 [shape = 'f32[1,1]{1,0:T(1,128)S(6)}', space=smem, size = 0x200, scoped, tag = 'scoped memory for tpu_custom_call.1']
  #allocation3 [shape = 'f32[1,1]{1,0:T(1,128)S(6)}', space=smem, size = 0x200, scoped, tag = 'scoped memory for tpu_custom_call.1']
  %s0 = inlined_call_operand.<no memory space> [shape: f32[1,1], index: 0, kind: input, shape index: {}]
  %s1 = inlined_call_operand.<no memory space> [shape: f32[1,1], index: 1, kind: input, shape index: {}]
  %s2 = inlined_call_operand.vmem [shape: f32[1,128], index: 2, kind: input, shape index: {}]
  %s3 = inlined_call_operand.hbm [shape: f32[1,128], index: 3, kind: output, shape index: {}]
  %s4 = sld [smem:[#allocation0]]
  $region22: #{tpu_custom_call.1} parent=0
    _
  %s6 = ssub.s32 1, %s4
  %s7 = scalar_select 0, %s6, %s4
  %8 = sst [smem:[#allocation2]] %s0
  %9 = sst [smem:[#allocation3]] %s1
  $region1: #{tpu_custom_call.1} parent=0
    #allocation4 [shape = 'u8[512]{0}', space=vmem, size = 0x400, scoped, tag = 'output window, operand 0, single buffered']
    #allocation5 [shape = 's32[1]{0}', space=sflag, size = 0x4, scoped, tag = 'scoped memory for tpu_custom_call.1']
    %10 = vsyncpa [#allocation5], 0
    // Predicated region
    $region2: #{tpu_custom_call.1} parent=1 // pred_check
      _
    $region3: #{tpu_custom_call.1} parent=1 // pred_check_branch
      %12 = sbr.rel (0) target = $region5
    $region4: #{tpu_custom_call.1} parent=1 // pred_region
      _
    $region5: #{tpu_custom_call.1} parent=1 // pred_fallthru
      _
    // Predicated region
    $region6: #{tpu_custom_call.1} parent=1 // pred_check
      _
    $region7: #{tpu_custom_call.1} parent=1 // pred_check_branch
      %14 = sbr.rel (0) target = $region9
    $region8: #{tpu_custom_call.1} parent=1 // pred_region
      _
    $region9: #{tpu_custom_call.1} parent=1 // pred_fallthru
      _
    // Predicated region
    $region10: #{tpu_custom_call.1} parent=1 // pred_check
      _
    $region11: #{tpu_custom_call.1} parent=1 // pred_check_branch
      %16 = sbr.rel (0) target = $region13
    $region12: #{tpu_custom_call.1} parent=1 // pred_region
      _
    $region13: #{tpu_custom_call.1} parent=1 // pred_fallthru
      _
    %s17 = sld [smem:[#allocation2]]
    %s18 = sld [smem:[#allocation3]]
    %v19 = vld [vmem:[%s2] sm:$0x1]
    %v20 = vstv %s17
    %v21 = vmul.f32 %v19, %v20
    %v22 = vstv %s18
    %v23 = vadd.f32 %v21, %v22
    %24 = vst [vmem:[#allocation4] sm:$0x1] %v23
    // Predicated region
    $region14: #{tpu_custom_call.1} parent=1 // pred_check
      _
    $region15: #{tpu_custom_call.1} parent=1 // pred_check_branch
      %26 = sbr.rel (0) target = $region17
    $region16: #{tpu_custom_call.1} parent=1 // pred_region
      %s28 = ssub.s32 16, 16
      %29 = vsyncadd [#allocation5], %s28
      %s31 = sshll.u32 [#allocation4], 4
      %s32 = int_to_ptr.vmem [resolvable:$true] %s31
      %34 = dma.vmem_to_hbm [thread:$0]  %s32, 16, %s3, [#allocation5]
    $region17: #{tpu_custom_call.1} parent=1 // pred_fallthru
      _
    // Predicated region
    $region18: #{tpu_custom_call.1} parent=1 // pred_check
      _
    $region19: #{tpu_custom_call.1} parent=1 // pred_check_branch
      %36 = sbr.rel (0) target = $region21
    $region20: #{tpu_custom_call.1} parent=1 // pred_region
      %37 = dma.done [#allocation5], 16
    $region21: #{tpu_custom_call.1} parent=1 // pred_fallthru
      _
    %38 = vsyncpa [#allocation5], 1

</llo_original>
